<compile_context>
chip_gen: v7x
topology: tpu7x:2x2x1
jax: 0.10.0
libtpu: 0.0.40
codegen_flags: <defaults>
</compile_context>

<pallas_src>
import functools

import jax
import jax.numpy as jnp
from jax.experimental import pallas as pl
from jax.experimental.pallas import tpu as pltpu

LANE = 128
SUBLANE = 8


def _round_up(n, m):
    return ((n + m - 1) // m) * m


def _cdiv(a, b):
    return (a + b - 1) // b


def _pack_factor(d):
    """How many samples we pack per 128-lane row (block-diagonal weights)."""
    return LANE // d if LANE % d == 0 else 1


# --------------------------------------------------------------------------- #
# Kernel: one (or several, via the inner grid axis) Euler steps on a row tile. #
# --------------------------------------------------------------------------- #
def euler_mlp_kernel(x_ref, w1_ref, b1_ref, w2_ref, b2_ref, w3h_ref, b3h_ref, o_ref):
    s = pl.program_id(1)

    # Step 0: load the state into the (VMEM-resident-across-steps) output block.
    @pl.when(s == 0)
    def _():
        o_ref[...] = x_ref[...]

    x = o_ref[...]  # [tb, Din_p] f32, lane-dense
    # net = Tanh -> Linear -> Tanh -> Linear -> Tanh -> Linear (h folded into layer 3)
    y = jnp.tanh(x).astype(jnp.bfloat16)
    y = jnp.dot(y, w1_ref[...], preferred_element_type=jnp.float32) + b1_ref[...]
    y = jnp.tanh(y).astype(jnp.bfloat16)
    y = jnp.dot(y, w2_ref[...], preferred_element_type=jnp.float32) + b2_ref[...]
    y = jnp.tanh(y).astype(jnp.bfloat16)
    k1h = jnp.dot(y, w3h_ref[...], preferred_element_type=jnp.float32) + b3h_ref[...]
    # Euler update: x + h * k1   (h already folded into w3h/b3h)
    o_ref[...] = x + k1h


# --------------------------------------------------------------------------- #
# One-time parameter preparation (hoisted out of the per-step path).          #
# --------------------------------------------------------------------------- #
def prepare_euler_params(params, h):
    """params: ((w1,b1),(w2,b2),(w3,b3)), w:[in,out] f32, b:[1,out] f32; h: scalar.
    Returns packed block-diagonal bf16 weights / tiled f32 biases with the Euler
    step size folded into the last layer. Call once, reuse every step."""
    (w1, b1), (w2, b2), (w3, b3) = params
    D = w1.shape[0]
    assert w3.shape[1] == D, "euler requires input dim == output dim"
    P = _pack_factor(D)
    h = jnp.float32(h)
    w3h, b3h = w3 * h, b3 * h

    def pack_w(w):
        wp = jax.scipy.linalg.block_diag(*([w] * P)) if P > 1 else w
        r = _round_up(wp.shape[0], LANE)
        c = _round_up(wp.shape[1], LANE)
        wp = jnp.pad(wp, ((0, r - wp.shape[0]), (0, c - wp.shape[1])))
        return wp.astype(jnp.bfloat16)

    def pack_b(b):
        bp = jnp.tile(b, (1, P))
        c = _round_up(bp.shape[1], LANE)
        return jnp.pad(bp, ((0, 0), (0, c - bp.shape[1]))).astype(jnp.float32)

    return (pack_w(w1), pack_b(b1),
            pack_w(w2), pack_b(b2),
            pack_w(w3h), pack_b(b3h))


# --------------------------------------------------------------------------- #
# Wrapper: x <- x + h*net(x), applied num_steps times in one kernel.          #
# --------------------------------------------------------------------------- #
@functools.partial(jax.jit, static_argnames=("tb", "num_steps"))
def euler_step(x, t, prepared, *, tb=512, num_steps=1):
    """x: [B, D] f32; t ignored (time_lag='uniform'); prepared from
    prepare_euler_params. Returns the state after num_steps Euler steps."""
    del t  # uniform time lag: the net never sees t
    w1, b1, w2, b2, w3h, b3h = prepared
    B, D = x.shape
    P = _pack_factor(D)
    Din_p = w1.shape[0]
    H1p = w1.shape[1]
    H2p = w2.shape[1]

    # Batch tiling in packed rows (each row = P samples).
    rows = _cdiv(B, P)
    tb = max(SUBLANE, min(tb, _round_up(rows, SUBLANE)))
    tb = _round_up(tb, SUBLANE)
    # Keep >= 2 grid steps when there is enough work (v7x: 2 TensorCores).
    if rows > 2 * SUBLANE and _round_up(rows, tb) // tb < 2:
        tb = _round_up(_cdiv(rows, 2), SUBLANE)
    rows_p = _round_up(rows, tb)
    grid = (rows_p // tb, num_steps)

    # Lane-dense packed state: [B, D] -> [rows_p, Din_p]. When B == rows_p*P and
    # P*D == Din_p (the common case) this is a pure reshape: no extra HBM pass.
    xf = x.astype(jnp.float32)
    if rows_p * P != B:
        xf = jnp.pad(xf, ((0, rows_p * P - B), (0, 0)))
    xp = xf.reshape(rows_p, P * D)
    if P * D != Din_p:
        xp = jnp.pad(xp, ((0, 0), (0, Din_p - P * D)))

    flops = 2 * rows_p * (Din_p * H1p + H1p * H2p + H2p * Din_p) * num_steps
    trans = rows_p * (Din_p + H1p + H2p) * num_steps
    bytes_acc = (2 * rows_p * Din_p * 4                               # x in + out
                 + 2 * (Din_p * H1p + H1p * H2p + H2p * Din_p)        # bf16 weights
                 + 4 * (H1p + H2p + Din_p))                           # f32 biases

    row_block = lambda i, s: (i, 0)   # state tiles stream over the batch axis only
    resident = lambda i, s: (0, 0)    # weights & biases stay VMEM-resident

    out_p = pl.pallas_call(
        euler_mlp_kernel,
        out_shape=jax.ShapeDtypeStruct((rows_p, Din_p), jnp.float32),
        grid_spec=pl.GridSpec(
            grid=grid,
            in_specs=[
                pl.BlockSpec((tb, Din_p), row_block),   # packed x
                pl.BlockSpec((Din_p, H1p), resident),   # w1 (block-diag, bf16)
                pl.BlockSpec((1, H1p), resident),       # b1
                pl.BlockSpec((H1p, H2p), resident),     # w2
                pl.BlockSpec((1, H2p), resident),       # b2
                pl.BlockSpec((H2p, Din_p), resident),   # w3 * h
                pl.BlockSpec((1, Din_p), resident),     # b3 * h
            ],
            out_specs=pl.BlockSpec((tb, Din_p), row_block),
        ),
        compiler_params=pltpu.CompilerParams(
            dimension_semantics=("parallel", "arbitrary"),
        ),
        cost_estimate=pl.CostEstimate(
            flops=flops, transcendentals=trans, bytes_accessed=bytes_acc),
    )(xp, w1, b1, w2, b2, w3h, b3h)

    out = out_p
    if P * D != Din_p:
        out = out[:, :P * D]
    out = out.reshape(rows_p * P, D)
    if rows_p * P != B:
        out = out[:B]
    return out


# --------------------------------------------------------------------------- #
# Init + references                                                           #
# --------------------------------------------------------------------------- #
def init_params(key, layers):
    """Mirror nn.init.normal_(w, 0, 1) and zero bias.
    Weights stored as [in, out] (transposed from PyTorch's [out, in])."""
    params = []
    for i in range(len(layers) - 1):
        key, sub = jax.random.split(key)
        w_pt = jax.random.normal(sub, (layers[i + 1], layers[i]), dtype=jnp.float32)
        params.append((w_pt.T, jnp.zeros((1, layers[i + 1]), dtype=jnp.float32)))
    return tuple(params)


def reference_euler_f32(x, params, h, num_steps=1):
    (w1, b1), (w2, b2), (w3, b3) = params
    for _ in range(num_steps):
        y = jnp.tanh(x)
        y = jnp.tanh(y @ w1 + b1)
        y = jnp.tanh(y @ w2 + b2)
        x = x + h * (y @ w3 + b3)
    return x


def reference_euler_bf16(x, params, h, num_steps=1):
    """Matches the kernel's numerics: bf16 matmul operands, f32 accumulation,
    h folded into the last layer before the bf16 cast, f32 tanh."""
    (w1, b1), (w2, b2), (w3, b3) = params

    def dot(a, b):
        return jnp.dot(a.astype(jnp.bfloat16), b.astype(jnp.bfloat16),
                       preferred_element_type=jnp.float32)

    for _ in range(num_steps):
        y = jnp.tanh(x)
        y = jnp.tanh(dot(y, w1) + b1)
        y = jnp.tanh(dot(y, w2) + b2)
        x = x + (dot(y, w3 * h) + b3 * h)
    return x


if __name__ == "__main__":
    # layers = [D, H, H, D] with Tanh activations (same net structure as the spec)
    layers = [32, 64, 64, 32]
    B = 256          # 64 packed rows -> grid=(2, steps): exercises the pipeline / both TCs
    h = 0.05
    t = 0.0          # ignored: time_lag='uniform'

    key = jax.random.PRNGKey(0)
    kx, kp = jax.random.split(key)
    x = jax.random.normal(kx, (B, layers[0]), dtype=jnp.float32)
    params = init_params(kp, layers)

    prepared = prepare_euler_params(params, h)   # one-time packing / h-folding

    # Single Euler step (the module's forward).
    out = jax.block_until_ready(euler_step(x, t, prepared))
    assert out.shape == (B, layers[0])
    assert jnp.allclose(out, reference_euler_bf16(x, params, h), atol=5e-3, rtol=5e-3), \
        "mismatch vs matched-precision (bf16-matmul) reference"
    assert jnp.allclose(out, reference_euler_f32(x, params, h), atol=5e-2, rtol=5e-2), \
        "mismatch vs f32 reference"

    # Fused multi-step path (state carried in VMEM across the step grid axis).
    out3 = jax.block_until_ready(euler_step(x, t, prepared, num_steps=3))
    assert jnp.allclose(out3, reference_euler_bf16(x, params, h, num_steps=3),
                        atol=1e-2, rtol=1e-2), \
        "mismatch vs matched-precision reference (fused 3 steps)"

    print("KERNEL_OK")
</pallas_src>

<mosaic_0001>
module attributes {stable_mosaic.version = 11 : i64} {
  func.func @euler_mlp_kernel(%arg0: i32, %arg1: i32, %arg2: memref<32x128xf32, #tpu.memory_space<vmem>>, %arg3: memref<128x256xbf16, #tpu.memory_space<vmem>>, %arg4: memref<1x256xf32, #tpu.memory_space<vmem>>, %arg5: memref<256x256xbf16, #tpu.memory_space<vmem>>, %arg6: memref<1x256xf32, #tpu.memory_space<vmem>>, %arg7: memref<256x128xbf16, #tpu.memory_space<vmem>>, %arg8: memref<1x128xf32, #tpu.memory_space<vmem>>, %arg9: memref<32x128xf32, #tpu.memory_space<vmem>>) attributes {dimension_semantics = [#tpu.dimension_semantics<parallel>, #tpu.dimension_semantics<arbitrary>], iteration_bounds = array<i64: 2, 1>, scalar_prefetch = 0 : i64, scratch_operands = 0 : i64, tpu.core_type = #tpu.core_type<tc>, window_params = [{transform_indices = @transform_0, window_bounds = array<i64: 32, 128>}, {pipeline_mode = #tpu.pipeline_mode<synchronous>, transform_indices = @transform_1, window_bounds = array<i64: 128, 256>}, {pipeline_mode = #tpu.pipeline_mode<synchronous>, transform_indices = @transform_2, window_bounds = array<i64: 1, 256>}, {pipeline_mode = #tpu.pipeline_mode<synchronous>, transform_indices = @transform_3, window_bounds = array<i64: 256, 256>}, {pipeline_mode = #tpu.pipeline_mode<synchronous>, transform_indices = @transform_4, window_bounds = array<i64: 1, 256>}, {pipeline_mode = #tpu.pipeline_mode<synchronous>, transform_indices = @transform_5, window_bounds = array<i64: 256, 128>}, {pipeline_mode = #tpu.pipeline_mode<synchronous>, transform_indices = @transform_6, window_bounds = array<i64: 1, 128>}, {transform_indices = @transform_7, window_bounds = array<i64: 32, 128>}]} {
    %c0_i32 = arith.constant 0 : i32
    %0 = arith.cmpi eq, %arg1, %c0_i32 : i32
    %1 = arith.extui %0 : i1 to i32
    %c0_i32_0 = arith.constant 0 : i32
    %2 = arith.cmpi ne, %1, %c0_i32_0 : i32
    scf.if %2 {
      %c0_18 = arith.constant 0 : index
      %c0_19 = arith.constant 0 : index
      %27 = vector.load %arg2[%c0_18, %c0_19] : memref<32x128xf32, #tpu.memory_space<vmem>>, vector<32x128xf32>
      %c0_20 = arith.constant 0 : index
      %c0_21 = arith.constant 0 : index
      %28 = vector.load %arg9[%c0_20, %c0_21] : memref<32x128xf32, #tpu.memory_space<vmem>>, vector<32x128xf32>
      tpu.vector_store %arg9[%c0_20, %c0_21], %27 {strides = array<i32>} : memref<32x128xf32, #tpu.memory_space<vmem>>, vector<32x128xf32>,
    } else {
    }
    %c0 = arith.constant 0 : index
    %c0_1 = arith.constant 0 : index
    %3 = vector.load %arg9[%c0, %c0_1] : memref<32x128xf32, #tpu.memory_space<vmem>>, vector<32x128xf32>
    %4 = math.tanh %3 : vector<32x128xf32>
    %5 = arith.truncf %4 : vector<32x128xf32> to vector<32x128xbf16>
    %c0_2 = arith.constant 0 : index
    %c0_3 = arith.constant 0 : index
    %6 = vector.load %arg3[%c0_2, %c0_3] : memref<128x256xbf16, #tpu.memory_space<vmem>>, vector<128x256xbf16>
    %cst = arith.constant dense<0.000000e+00> : vector<32x256xf32>
    %7 = tpu.matmul %5, %6, %cst {dimension_numbers = #tpu.dot_dimension_numbers<[1], [0], [0], [1], [0, 0, 1, 1], [], []>} : vector<32x128xbf16>, vector<128x256xbf16>, vector<32x256xf32> -> vector<32x256xf32>
    %c0_4 = arith.constant 0 : index
    %c0_5 = arith.constant 0 : index
    %8 = vector.load %arg4[%c0_4, %c0_5] : memref<1x256xf32, #tpu.memory_space<vmem>>, vector<1x256xf32>
    %9 = vector.broadcast %8 : vector<1x256xf32> to vector<32x256xf32>
    %10 = arith.addf %7, %9 : vector<32x256xf32>
    %11 = math.tanh %10 : vector<32x256xf32>
    %12 = arith.truncf %11 : vector<32x256xf32> to vector<32x256xbf16>
    %c0_6 = arith.constant 0 : index
    %c0_7 = arith.constant 0 : index
    %13 = vector.load %arg5[%c0_6, %c0_7] : memref<256x256xbf16, #tpu.memory_space<vmem>>, vector<256x256xbf16>
    %cst_8 = arith.constant dense<0.000000e+00> : vector<32x256xf32>
    %14 = tpu.matmul %12, %13, %cst_8 {dimension_numbers = #tpu.dot_dimension_numbers<[1], [0], [0], [1], [0, 0, 1, 1], [], []>} : vector<32x256xbf16>, vector<256x256xbf16>, vector<32x256xf32> -> vector<32x256xf32>
    %c0_9 = arith.constant 0 : index
    %c0_10 = arith.constant 0 : index
    %15 = vector.load %arg6[%c0_9, %c0_10] : memref<1x256xf32, #tpu.memory_space<vmem>>, vector<1x256xf32>
    %16 = vector.broadcast %15 : vector<1x256xf32> to vector<32x256xf32>
    %17 = arith.addf %14, %16 : vector<32x256xf32>
    %18 = math.tanh %17 : vector<32x256xf32>
    %19 = arith.truncf %18 : vector<32x256xf32> to vector<32x256xbf16>
    %c0_11 = arith.constant 0 : index
    %c0_12 = arith.constant 0 : index
    %20 = vector.load %arg7[%c0_11, %c0_12] : memref<256x128xbf16, #tpu.memory_space<vmem>>, vector<256x128xbf16>
    %cst_13 = arith.constant dense<0.000000e+00> : vector<32x128xf32>
    %21 = tpu.matmul %19, %20, %cst_13 {dimension_numbers = #tpu.dot_dimension_numbers<[1], [0], [0], [1], [0, 0, 1, 1], [], []>} : vector<32x256xbf16>, vector<256x128xbf16>, vector<32x128xf32> -> vector<32x128xf32>
    %c0_14 = arith.constant 0 : index
    %c0_15 = arith.constant 0 : index
    %22 = vector.load %arg8[%c0_14, %c0_15] : memref<1x128xf32, #tpu.memory_space<vmem>>, vector<1x128xf32>
    %23 = vector.broadcast %22 : vector<1x128xf32> to vector<32x128xf32>
    %24 = arith.addf %21, %23 : vector<32x128xf32>
    %25 = arith.addf %3, %24 : vector<32x128xf32>
    %c0_16 = arith.constant 0 : index
    %c0_17 = arith.constant 0 : index
    %26 = vector.load %arg9[%c0_16, %c0_17] : memref<32x128xf32, #tpu.memory_space<vmem>>, vector<32x128xf32>
    tpu.vector_store %arg9[%c0_16, %c0_17], %25 {strides = array<i32>} : memref<32x128xf32, #tpu.memory_space<vmem>>, vector<32x128xf32>,
    return
  }
  func.func @transform_0(%arg0: i32, %arg1: i32) -> (i32, i32) {
    %c0_i32 = arith.constant 0 : i32
    %c0_i32_0 = arith.constant 0 : i32
    return %arg0, %c0_i32 : i32, i32
  }
  func.func @transform_1(%arg0: i32, %arg1: i32) -> (i32, i32) {
    %c0_i32 = arith.constant 0 : i32
    %c0_i32_0 = arith.constant 0 : i32
    %c0_i32_1 = arith.constant 0 : i32
    return %c0_i32, %c0_i32_0 : i32, i32
  }
  func.func @transform_2(%arg0: i32, %arg1: i32) -> (i32, i32) {
    %c0_i32 = arith.constant 0 : i32
    %c0_i32_0 = arith.constant 0 : i32
    %c0_i32_1 = arith.constant 0 : i32
    return %c0_i32, %c0_i32_0 : i32, i32
  }
  func.func @transform_3(%arg0: i32, %arg1: i32) -> (i32, i32) {
    %c0_i32 = arith.constant 0 : i32
    %c0_i32_0 = arith.constant 0 : i32
    %c0_i32_1 = arith.constant 0 : i32
    return %c0_i32, %c0_i32_0 : i32, i32
  }
  func.func @transform_4(%arg0: i32, %arg1: i32) -> (i32, i32) {
    %c0_i32 = arith.constant 0 : i32
    %c0_i32_0 = arith.constant 0 : i32
    %c0_i32_1 = arith.constant 0 : i32
    return %c0_i32, %c0_i32_0 : i32, i32
  }
  func.func @transform_5(%arg0: i32, %arg1: i32) -> (i32, i32) {
    %c0_i32 = arith.constant 0 : i32
    %c0_i32_0 = arith.constant 0 : i32
    %c0_i32_1 = arith.constant 0 : i32
    return %c0_i32, %c0_i32_0 : i32, i32
  }
  func.func @transform_6(%arg0: i32, %arg1: i32) -> (i32, i32) {
    %c0_i32 = arith.constant 0 : i32
    %c0_i32_0 = arith.constant 0 : i32
    %c0_i32_1 = arith.constant 0 : i32
    return %c0_i32, %c0_i32_0 : i32, i32
  }
  func.func @transform_7(%arg0: i32, %arg1: i32) -> (i32, i32) {
    %c0_i32 = arith.constant 0 : i32
    %c0_i32_0 = arith.constant 0 : i32
    return %arg0, %c0_i32 : i32, i32
  }
}

</mosaic_0001>

<llo_original>
// kernel: euler_step.1
$region0: #{euler_step.1}
  #allocation0 [shape = 'u32[]', space=smem, size = 0x4, offset = 0x4, fixed_abs, tag = 'smem constant byte address 0x4 - core index']
  #allocation1 [shape = 'u32[144,128]{1,0:T(1,128)}', space=vmem, size = 0x12000, scoped, tag = 'internal scratch']
  %s0 = inlined_call_operand.vmem [shape: f32[64,128], index: 0, kind: input, shape index: {}]
  %s1 = inlined_call_operand.vmem [shape: bf16[128,256], index: 1, kind: input, shape index: {}]
  %s2 = inlined_call_operand.vmem [shape: f32[1,256], index: 2, kind: input, shape index: {}]
  %s3 = inlined_call_operand.vmem [shape: bf16[256,256], index: 3, kind: input, shape index: {}]
  %s4 = inlined_call_operand.vmem [shape: f32[1,256], index: 4, kind: input, shape index: {}]
  %s5 = inlined_call_operand.vmem [shape: bf16[256,128], index: 5, kind: input, shape index: {}]
  %s6 = inlined_call_operand.vmem [shape: f32[1,128], index: 6, kind: input, shape index: {}]
  %s7 = inlined_call_operand.vmem [shape: f32[64,128], index: 7, kind: output, shape index: {}]
  %s8 = sld [smem:[#allocation0]]
  $region65: #{euler_step.1} parent=0
    _
  %s10 = ssub.s32 1, %s8
  %s11 = scalar_select 0, %s10, %s8
  loop: start=0, step=1, limit=4
  $region2: #{euler_step.1} parent=0 // loop_pre_header
    _
  $region3: #{euler_step.1} parent=0 // loop_header
    %s13 = sphi 0, %s17
    %p14 = scmp.ge.s32.totalorder %s13, 4
    %s20 = sphi 0, %s32
    %s21 = sphi 0, %s28
    %s22 = sphi 0, %s20
    %s23 = sphi 0, %s21
    %s24 = sphi 0, %s22
    %s25 = sphi 0, %s23
    %s35 = sphi 0, %s37
    %s38 = sphi 0, %s35
    %s39 = sphi 0, %s38
    %s55 = sphi 0, %s39
    %s59 = sphi 0, %s59
    %s61 = sphi 0, %s59
    %s62 = sphi 0, %s61
    %s76 = sphi 0, %s62
    %s80 = sphi 0, %s80
    %s82 = sphi 0, %s80
    %s83 = sphi 0, %s82
    %s97 = sphi 0, %s83
    %s101 = sphi 0, %s101
    %s103 = sphi 0, %s101
    %s104 = sphi 0, %s103
    %s118 = sphi 0, %s104
    %s122 = sphi 0, %s122
    %s124 = sphi 0, %s122
    %s125 = sphi 0, %s124
    %s139 = sphi 0, %s125
    %s143 = sphi 0, %s143
    %s145 = sphi 0, %s143
    %s146 = sphi 0, %s145
    %s160 = sphi 0, %s146
    %s164 = sphi 0, %s164
    %s166 = sphi 0, %s164
    %s167 = sphi 0, %s166
    %s181 = sphi 0, %s167
    %s187 = sphi 0, %s189
    %s190 = sphi 0, %s187
    %s191 = sphi 0, %s190
    %s207 = sphi 0, %s191
  $region4: #{euler_step.1} parent=0 // loop_header_branch
    %16 = sbr.rel (%p14) target = $region8
  $region5: #{euler_step.1} parent=0 // loop_body
    %s18 = ssub.s32 %s13, 1
    %s19 = ssub.s32 %s13, 2
    %s26 = sadd.s32 1, %s21
    %p27 = scmp.ge.s32.totalorder %s26, 1
    %s28 = scalar_select %p27, 0, %s26
    %s29 = sadd.s32 1, %s20
    %s30 = scalar_select %p27, %s29, %s20
    %p31 = scmp.ge.s32.totalorder %s30, 2
    %s32 = scalar_select %p31, 0, %s30
    %s33 = ssub.s32 %s20, %s32
    %p34 = scmp.eq.s32.totalorder %s33, 0
    %s36 = sadd.s32 %s35, 1
    %s37 = scalar_select %p34, %s35, %s36
    %p40 = pneg %p34
    %p41 = scmp.eq.s32.totalorder %s13, 1
    %p42 = por %p40, %p41
    %p43 = scmp.ne.s32.totalorder %s35, %s38
    %p44 = scmp.eq.s32.totalorder %s13, 0
    %p45 = por %p43, %p44
    %p46 = scmp.ne.s32.totalorder %s35, %s38
    %p47 = scmp.eq.s32.totalorder %s18, 1
    %p48 = por %p46, %p47
    %p49 = scmp.ne.s32.totalorder %s38, %s39
    %p50 = scmp.eq.s32.totalorder %s18, 0
    %p51 = por %p49, %p50
    %p52 = scmp.ne.s32.totalorder %s38, %s39
    %p53 = scmp.eq.s32.totalorder %s19, 1
    %p54 = por %p52, %p53
    %p56 = scmp.ne.s32.totalorder %s39, %s55
    %p57 = scmp.eq.s32.totalorder %s19, 0
    %p58 = por %p56, %p57
    %s60 = sadd.s32 %s59, 1
    %p63 = scmp.eq.s32.totalorder %s13, 1
    %p64 = scmp.ne.s32.totalorder %s59, %s61
    %p65 = scmp.eq.s32.totalorder %s13, 0
    %p66 = por %p64, %p65
    %p67 = scmp.ne.s32.totalorder %s59, %s61
    %p68 = scmp.eq.s32.totalorder %s18, 1
    %p69 = por %p67, %p68
    %p70 = scmp.ne.s32.totalorder %s61, %s62
    %p71 = scmp.eq.s32.totalorder %s18, 0
    %p72 = por %p70, %p71
    %p73 = scmp.ne.s32.totalorder %s61, %s62
    %p74 = scmp.eq.s32.totalorder %s19, 1
    %p75 = por %p73, %p74
    %p77 = scmp.ne.s32.totalorder %s62, %s76
    %p78 = scmp.eq.s32.totalorder %s19, 0
    %p79 = por %p77, %p78
    %s81 = sadd.s32 %s80, 1
    %p84 = scmp.eq.s32.totalorder %s13, 1
    %p85 = scmp.ne.s32.totalorder %s80, %s82
    %p86 = scmp.eq.s32.totalorder %s13, 0
    %p87 = por %p85, %p86
    %p88 = scmp.ne.s32.totalorder %s80, %s82
    %p89 = scmp.eq.s32.totalorder %s18, 1
    %p90 = por %p88, %p89
    %p91 = scmp.ne.s32.totalorder %s82, %s83
    %p92 = scmp.eq.s32.totalorder %s18, 0
    %p93 = por %p91, %p92
    %p94 = scmp.ne.s32.totalorder %s82, %s83
    %p95 = scmp.eq.s32.totalorder %s19, 1
    %p96 = por %p94, %p95
    %p98 = scmp.ne.s32.totalorder %s83, %s97
    %p99 = scmp.eq.s32.totalorder %s19, 0
    %p100 = por %p98, %p99
    %s102 = sadd.s32 %s101, 1
    %p105 = scmp.eq.s32.totalorder %s13, 1
    %p106 = scmp.ne.s32.totalorder %s101, %s103
    %p107 = scmp.eq.s32.totalorder %s13, 0
    %p108 = por %p106, %p107
    %p109 = scmp.ne.s32.totalorder %s101, %s103
    %p110 = scmp.eq.s32.totalorder %s18, 1
    %p111 = por %p109, %p110
    %p112 = scmp.ne.s32.totalorder %s103, %s104
    %p113 = scmp.eq.s32.totalorder %s18, 0
    %p114 = por %p112, %p113
    %p115 = scmp.ne.s32.totalorder %s103, %s104
    %p116 = scmp.eq.s32.totalorder %s19, 1
    %p117 = por %p115, %p116
    %p119 = scmp.ne.s32.totalorder %s104, %s118
    %p120 = scmp.eq.s32.totalorder %s19, 0
    %p121 = por %p119, %p120
    %s123 = sadd.s32 %s122, 1
    %p126 = scmp.eq.s32.totalorder %s13, 1
    %p127 = scmp.ne.s32.totalorder %s122, %s124
    %p128 = scmp.eq.s32.totalorder %s13, 0
    %p129 = por %p127, %p128
    %p130 = scmp.ne.s32.totalorder %s122, %s124
    %p131 = scmp.eq.s32.totalorder %s18, 1
    %p132 = por %p130, %p131
    %p133 = scmp.ne.s32.totalorder %s124, %s125
    %p134 = scmp.eq.s32.totalorder %s18, 0
    %p135 = por %p133, %p134
    %p136 = scmp.ne.s32.totalorder %s124, %s125
    %p137 = scmp.eq.s32.totalorder %s19, 1
    %p138 = por %p136, %p137
    %p140 = scmp.ne.s32.totalorder %s125, %s139
    %p141 = scmp.eq.s32.totalorder %s19, 0
    %p142 = por %p140, %p141
    %s144 = sadd.s32 %s143, 1
    %p147 = scmp.eq.s32.totalorder %s13, 1
    %p148 = scmp.ne.s32.totalorder %s143, %s145
    %p149 = scmp.eq.s32.totalorder %s13, 0
    %p150 = por %p148, %p149
    %p151 = scmp.ne.s32.totalorder %s143, %s145
    %p152 = scmp.eq.s32.totalorder %s18, 1
    %p153 = por %p151, %p152
    %p154 = scmp.ne.s32.totalorder %s145, %s146
    %p155 = scmp.eq.s32.totalorder %s18, 0
    %p156 = por %p154, %p155
    %p157 = scmp.ne.s32.totalorder %s145, %s146
    %p158 = scmp.eq.s32.totalorder %s19, 1
    %p159 = por %p157, %p158
    %p161 = scmp.ne.s32.totalorder %s146, %s160
    %p162 = scmp.eq.s32.totalorder %s19, 0
    %p163 = por %p161, %p162
    %s165 = sadd.s32 %s164, 1
    %p168 = scmp.eq.s32.totalorder %s13, 1
    %p169 = scmp.ne.s32.totalorder %s164, %s166
    %p170 = scmp.eq.s32.totalorder %s13, 0
    %p171 = por %p169, %p170
    %p172 = scmp.ne.s32.totalorder %s164, %s166
    %p173 = scmp.eq.s32.totalorder %s18, 1
    %p174 = por %p172, %p173
    %p175 = scmp.ne.s32.totalorder %s166, %s167
    %p176 = scmp.eq.s32.totalorder %s18, 0
    %p177 = por %p175, %p176
    %p178 = scmp.ne.s32.totalorder %s166, %s167
    %p179 = scmp.eq.s32.totalorder %s19, 1
    %p180 = por %p178, %p179
    %p182 = scmp.ne.s32.totalorder %s167, %s181
    %p183 = scmp.eq.s32.totalorder %s19, 0
    %p184 = por %p182, %p183
    %s185 = ssub.s32 %s20, %s32
    %p186 = scmp.eq.s32.totalorder %s185, 0
    %s188 = sadd.s32 %s187, 1
    %s189 = scalar_select %p186, %s187, %s188
    %p192 = pneg %p186
    %p193 = scmp.eq.s32.totalorder %s13, 1
    %p194 = por %p192, %p193
    %p195 = scmp.ne.s32.totalorder %s187, %s190
    %p196 = scmp.eq.s32.totalorder %s13, 0
    %p197 = por %p195, %p196
    %p198 = scmp.ne.s32.totalorder %s187, %s190
    %p199 = scmp.eq.s32.totalorder %s18, 1
    %p200 = por %p198, %p199
    %p201 = scmp.ne.s32.totalorder %s190, %s191
    %p202 = scmp.eq.s32.totalorder %s18, 0
    %p203 = por %p201, %p202
    %p204 = scmp.ne.s32.totalorder %s190, %s191
    %p205 = scmp.eq.s32.totalorder %s19, 1
    %p206 = por %p204, %p205
    %p208 = scmp.ne.s32.totalorder %s191, %s207
    %p209 = scmp.eq.s32.totalorder %s19, 0
    %p210 = por %p208, %p209
    %p211 = scmp.le.s32.totalorder 1, %s13
    %p212 = scmp.lt.s32.totalorder %s13, 3
    %p213 = pnand %p211, %p212
    %p214 = pneg %p213
    // Predicated region
    $region9: #{euler_step.1} parent=5 // pred_check
      _
    $region10: #{euler_step.1} parent=5 // pred_check_branch
      %216 = sbr.rel (%p213) target = $region12
    $region11: #{euler_step.1} parent=5 // pred_region
      %s217 = ssub.s32 %s13, 1
      // Predicated region
      $region13: #{euler_step.1} parent=11 // pred_check
        %p218 = pneg %p72
      $region14: #{euler_step.1} parent=11 // pred_check_branch
        %220 = sbr.rel (%p218) target = $region16
      $region15: #{euler_step.1} parent=11 // pred_region
        _
      $region16: #{euler_step.1} parent=11 // pred_fallthru
        _
      // Predicated region
      $region17: #{euler_step.1} parent=11 // pred_check
        %p221 = pneg %p93
      $region18: #{euler_step.1} parent=11 // pred_check_branch
        %223 = sbr.rel (%p221) target = $region20
      $region19: #{euler_step.1} parent=11 // pred_region
        _
      $region20: #{euler_step.1} parent=11 // pred_fallthru
        _
      // Predicated region
      $region21: #{euler_step.1} parent=11 // pred_check
        %p224 = pneg %p114
      $region22: #{euler_step.1} parent=11 // pred_check_branch
        %226 = sbr.rel (%p224) target = $region24
      $region23: #{euler_step.1} parent=11 // pred_region
        _
      $region24: #{euler_step.1} parent=11 // pred_fallthru
        _
      // Predicated region
      $region25: #{euler_step.1} parent=11 // pred_check
        %p227 = pneg %p135
      $region26: #{euler_step.1} parent=11 // pred_check_branch
        %229 = sbr.rel (%p227) target = $region28
      $region27: #{euler_step.1} parent=11 // pred_region
        _
      $region28: #{euler_step.1} parent=11 // pred_fallthru
        _
      // Predicated region
      $region29: #{euler_step.1} parent=11 // pred_check
        %p230 = pneg %p156
      $region30: #{euler_step.1} parent=11 // pred_check_branch
        %232 = sbr.rel (%p230) target = $region32
      $region31: #{euler_step.1} parent=11 // pred_region
        _
      $region32: #{euler_step.1} parent=11 // pred_fallthru
        _
      // Predicated region
      $region33: #{euler_step.1} parent=11 // pred_check
        %p233 = pneg %p177
      $region34: #{euler_step.1} parent=11 // pred_check_branch
        %235 = sbr.rel (%p233) target = $region36
      $region35: #{euler_step.1} parent=11 // pred_region
        _
      $region36: #{euler_step.1} parent=11 // pred_fallthru
        _
    $region12: #{euler_step.1} parent=5 // pred_fallthru
      _
    %p236 = scmp.lt.s32.totalorder %s13, 2
    // Predicated region
    $region37: #{euler_step.1} parent=5 // pred_check
      %p237 = pneg %p236
    $region38: #{euler_step.1} parent=5 // pred_check_branch
      %239 = sbr.rel (%p237) target = $region40
    $region39: #{euler_step.1} parent=5 // pred_region
      // Predicated region
      $region41: #{euler_step.1} parent=39 // pred_check
        %p240 = pneg %p45
      $region42: #{euler_step.1} parent=39 // pred_check_branch
        %242 = sbr.rel (%p240) target = $region44
      $region43: #{euler_step.1} parent=39 // pred_region
        %s243 = smul.u32 4, %s20
        %p244 = scmp.lt.s32.totalorder %s243, 7
        %s245 = scalar_select %p244, %s243, 7
        %s246 = smul.addr %s245, 8
        %s247 = scalar_lea.vmem %s0, %s246
        %s248 = smul.u32 4, %s20
      $region44: #{euler_step.1} parent=39 // pred_fallthru
        _
    $region40: #{euler_step.1} parent=5 // pred_fallthru
      _
    %p249 = scmp.le.s32.totalorder 1, %s13
    %p250 = scmp.lt.s32.totalorder %s13, 3
    %p251 = pnand %p249, %p250
    %p252 = pneg %p251
    // Predicated region
    $region45: #{euler_step.1} parent=5 // pred_check
      _
    $region46: #{euler_step.1} parent=5 // pred_check_branch
      %254 = sbr.rel (%p251) target = $region48
    $region47: #{euler_step.1} parent=5 // pred_region
      %s255 = ssub.s32 %s13, 1
      %s256 = smul.u32 4, %s22
      %p257 = scmp.lt.s32.totalorder %s256, 7
      %s258 = scalar_select %p257, %s256, 7
      %s259 = smul.addr %s258, 8
      %s260 = scalar_lea.vmem %s0, %s259
      %p261 = pneg %p51
      %p262 = pneg %p48
      %p263 = pneg %p72
      %p264 = pneg %p69
      %p265 = pneg %p93
      %p266 = pneg %p90
      %p267 = pneg %p114
      %p268 = pneg %p111
      %p269 = pneg %p135
      %p270 = pneg %p132
      %p271 = pneg %p156
      %p272 = pneg %p153
      %p273 = pneg %p177
      %p274 = pneg %p174
      %p275 = pneg %p203
      %p276 = pneg %p200
      %s277 = smul.u32 4, %s22
      %p278 = scmp.lt.s32.totalorder %s277, 7
      %s279 = scalar_select %p278, %s277, 7
      %s280 = smul.addr %s279, 8
      %s281 = scalar_lea.vmem %s7, %s280
      %s282 = smul.u32 4, %s22
      %p283 = scmp.lt.s32.totalorder %s282, 7
      %s284 = scalar_select %p283, %s282, 7
      %s285 = smul.addr %s284, 8
      %s286 = scalar_lea.vmem %s0, %s285
      %s287 = smul.u32 4, %s22
      %s288 = smul.u32 4, %s22
      %p289 = scmp.lt.s32.totalorder %s288, 7
      %s290 = scalar_select %p289, %s288, 7
      %s291 = smul.addr %s290, 8
      %s292 = scalar_lea.vmem %s7, %s291
      %s293 = smul.u32 4, %s22
      %p295 = scmp.eq.s32.totalorder %s23, 0
      // Predicated region
      $region49: #{euler_step.1} parent=47 // pred_check
        %p296 = pneg %p295
      $region50: #{euler_step.1} parent=47 // pred_check_branch
        %298 = sbr.rel (%p296) target = $region52
      $region51: #{euler_step.1} parent=47 // pred_region
        %v299 = vld [vmem:[%s286] sm:$0xff]
        %v300 = vld [vmem:[%s286 + $0x8] sm:$0xff]
        %v301 = vld [vmem:[%s286 + $0x10] sm:$0xff]
        %v302 = vld [vmem:[%s286 + $0x18] sm:$0xff]
        %303 = vst [vmem:[%s292] sm:$0xff] %v299
        %304 = vst [vmem:[%s292 + $0x8] sm:$0xff] %v300
        %305 = vst [vmem:[%s292 + $0x10] sm:$0xff] %v301
        %306 = vst [vmem:[%s292 + $0x18] sm:$0xff] %v302
      $region52: #{euler_step.1} parent=47 // pred_fallthru
        _
      %v307 = vld [vmem:[%s292] sm:$0xff]
      %v308 = vld [vmem:[%s292 + $0x8] sm:$0xff]
      %v309 = vld [vmem:[%s292 + $0x10] sm:$0xff]
      %v310 = vld [vmem:[%s292 + $0x18] sm:$0xff]
      %v311 = vtanh.pop %v307
      %v312 = vtanh.pop %v308
      %v313 = vtanh.pop %v309
      %v314 = vtanh.pop %v310
      %v315 = vpack.c.bf16 %v312, %v311
      %v316 = vpack.c.bf16 %v314, %v313
      %v317 = vld [vmem:[%s1] sm:$0xff]
      %v318 = vld [vmem:[%s1 + $0x8] sm:$0xff]
      %v319 = vld [vmem:[%s1 + $0x10] sm:$0xff]
      %v320 = vld [vmem:[%s1 + $0x18] sm:$0xff]
      %v321 = vld [vmem:[%s1 + $0x20] sm:$0xff]
      %v322 = vld [vmem:[%s1 + $0x28] sm:$0xff]
      %v323 = vld [vmem:[%s1 + $0x30] sm:$0xff]
      %v324 = vld [vmem:[%s1 + $0x38] sm:$0xff]
      %v325 = vld [vmem:[%s1 + $0x40] sm:$0xff]
      %v326 = vld [vmem:[%s1 + $0x48] sm:$0xff]
      %v327 = vld [vmem:[%s1 + $0x50] sm:$0xff]
      %v328 = vld [vmem:[%s1 + $0x58] sm:$0xff]
      %v329 = vld [vmem:[%s1 + $0x60] sm:$0xff]
      %v330 = vld [vmem:[%s1 + $0x68] sm:$0xff]
      %v331 = vld [vmem:[%s1 + $0x70] sm:$0xff]
      %v332 = vld [vmem:[%s1 + $0x78] sm:$0xff]
      %v333 = vld [vmem:[%s2] sm:$0x3]
      %v335 = vlaneseq
      %v336 = vshrl.u32 %v335, 7
      %v337 = vsub.s32 0, %v336
      %v338 = vrot.slane %v333, %v337
      %v339 = vlaneseq
      %v340 = vshrl.u32 %v339, 7
      %v341 = vsub.s32 1, %v340
      %v342 = vrot.slane %v333, %v341
      %v361 = vunpack.c.l.b16 %v317
      %v362 = vunpack.c.h.b16 %v317
      %v363 = vunpack.c.l.b16 %v318
      %v364 = vunpack.c.h.b16 %v318
      %v365 = vunpack.c.l.b16 %v319
      %v366 = vunpack.c.h.b16 %v319
      %v367 = vunpack.c.l.b16 %v320
      %v368 = vunpack.c.h.b16 %v320
      %v369 = vunpack.c.l.b16 %v321
      %v370 = vunpack.c.h.b16 %v321
      %v371 = vunpack.c.l.b16 %v322
      %v372 = vunpack.c.h.b16 %v322
      %v373 = vunpack.c.l.b16 %v323
      %v374 = vunpack.c.h.b16 %v323
      %v375 = vunpack.c.l.b16 %v324
      %v376 = vunpack.c.h.b16 %v324
      %v377 = vunpack.c.l.b16 %v325
      %v378 = vunpack.c.h.b16 %v325
      %v379 = vunpack.c.l.b16 %v326
      %v380 = vunpack.c.h.b16 %v326
      %v381 = vunpack.c.l.b16 %v327
      %v382 = vunpack.c.h.b16 %v327
      %v383 = vunpack.c.l.b16 %v328
      %v384 = vunpack.c.h.b16 %v328
      %v385 = vunpack.c.l.b16 %v329
      %v386 = vunpack.c.h.b16 %v329
      %v387 = vunpack.c.l.b16 %v330
      %v388 = vunpack.c.h.b16 %v330
      %v389 = vunpack.c.l.b16 %v331
      %v390 = vunpack.c.h.b16 %v331
      %v391 = vunpack.c.l.b16 %v332
      %v392 = vunpack.c.h.b16 %v332
      %v393 = vpack.c.b16 %v363, %v361
      %v394 = vpack.c.b16 %v364, %v362
      %v395 = vpack.c.b16 %v367, %v365
      %v396 = vpack.c.b16 %v368, %v366
      %v397 = vpack.c.b16 %v371, %v369
      %v398 = vpack.c.b16 %v372, %v370
      %v399 = vpack.c.b16 %v375, %v373
      %v400 = vpack.c.b16 %v376, %v374
      %v401 = vpack.c.b16 %v379, %v377
      %v402 = vpack.c.b16 %v380, %v378
      %v403 = vpack.c.b16 %v383, %v381
      %v404 = vpack.c.b16 %v384, %v382
      %v405 = vpack.c.b16 %v387, %v385
      %v406 = vpack.c.b16 %v388, %v386
      %v407 = vpack.c.b16 %v391, %v389
      %v408 = vpack.c.b16 %v392, %v390
      %425 = vmatprep.subr.bf16.mxu0 %v394
      %426 = vmatpush1.bf16.msra.mxu0 %v393
      %427 = vmatprep.subr.bf16.mxu0 %v396
      %428 = vmatpush1.bf16.msra.mxu0 %v395
      %429 = vmatprep.subr.bf16.mxu0 %v398
      %430 = vmatpush1.bf16.msra.mxu0 %v397
      %431 = vmatprep.subr.bf16.mxu0 %v400
      %432 = vmatpush1.bf16.msra.mxu0 %v399
      %433 = vmatprep.subr.bf16.mxu0 %v402
      %434 = vmatpush1.bf16.msra.mxu0 %v401
      %435 = vmatprep.subr.bf16.mxu0 %v404
      %436 = vmatpush1.bf16.msra.mxu0 %v403
      %437 = vmatprep.subr.bf16.mxu0 %v406
      %438 = vmatpush1.bf16.msra.mxu0 %v405
      %439 = vmatprep.subr.bf16.mxu0 %v408
      %440 = vmatpush1.bf16.msra.mxu0 %v407
      %441 = vmatprep.subr.bf16.mxu0 0
      %442 = vmatpush1.bf16.msra.mxu0 0
      %443 = vmatprep.subr.bf16.mxu0 0
      %444 = vmatpush1.bf16.msra.mxu0 0
      %445 = vmatprep.subr.bf16.mxu0 0
      %446 = vmatpush1.bf16.msra.mxu0 0
      %447 = vmatprep.subr.bf16.mxu0 0
      %448 = vmatpush1.bf16.msra.mxu0 0
      %449 = vmatprep.subr.bf16.mxu0 0
      %450 = vmatpush1.bf16.msra.mxu0 0
      %451 = vmatprep.subr.bf16.mxu0 0
      %452 = vmatpush1.bf16.msra.mxu0 0
      %453 = vmatprep.subr.bf16.mxu0 0
      %454 = vmatpush1.bf16.msra.mxu0 0
      %455 = vmatprep.subr.bf16.mxu0 0
      %456 = vmatpush1.bf16.msra.mxu0 0
      %457 = vmatprep.mubr.bf16.mxu0 0
      %458 = vmatmul.mubr.bf16.gmra.mrb[0].mxu0 %v315
      %v459 = vpop.f32.mrb[0].mxu0
      %v460 = vadd.f32 %v338, %v459
      %v461 = vpop.f32.mrb[0].mxu0
      %v462 = vadd.f32 %v342, %v461
      %v463 = vpop.f32.mrb[0].mxu0
      %v464 = vadd.f32 %v338, %v463
      %v465 = vpop.f32.mrb[0].mxu0
      %v466 = vadd.f32 %v342, %v465
      %467 = vmatprep.mubr.bf16.mxu0 0
      %468 = vmatmul.mubr.bf16.gmra.mrb[0].mxu0 %v316
      %v469 = vpop.f32.mrb[0].mxu0
      %v470 = vadd.f32 %v338, %v469
      %v471 = vpop.f32.mrb[0].mxu0
      %v472 = vadd.f32 %v342, %v471
      %v473 = vpop.f32.mrb[0].mxu0
      %v474 = vadd.f32 %v338, %v473
      %v475 = vpop.f32.mrb[0].mxu0
      %v476 = vadd.f32 %v342, %v475
      %477 = vdwg.mxu0
      %v478 = vtanh.pop %v460
      %v479 = vtanh.pop %v462
      %v480 = vtanh.pop %v464
      %v481 = vtanh.pop %v466
      %v482 = vtanh.pop %v470
      %v483 = vtanh.pop %v472
      %v484 = vtanh.pop %v474
      %v485 = vtanh.pop %v476
      %v486 = vpack.c.bf16 %v480, %v478
      %v487 = vpack.c.bf16 %v481, %v479
      %v488 = vpack.c.bf16 %v484, %v482
      %v489 = vpack.c.bf16 %v485, %v483
      %v490 = vld [vmem:[%s3] sm:$0xff]
      %v491 = vld [vmem:[%s3 + $0x8] sm:$0xff]
      %v492 = vld [vmem:[%s3 + $0x10] sm:$0xff]
      %v493 = vld [vmem:[%s3 + $0x18] sm:$0xff]
      %v494 = vld [vmem:[%s3 + $0x20] sm:$0xff]
      %v495 = vld [vmem:[%s3 + $0x28] sm:$0xff]
      %v496 = vld [vmem:[%s3 + $0x30] sm:$0xff]
      %v497 = vld [vmem:[%s3 + $0x38] sm:$0xff]
      %v498 = vld [vmem:[%s3 + $0x40] sm:$0xff]
      %v499 = vld [vmem:[%s3 + $0x48] sm:$0xff]
      %v500 = vld [vmem:[%s3 + $0x50] sm:$0xff]
      %v501 = vld [vmem:[%s3 + $0x58] sm:$0xff]
      %v502 = vld [vmem:[%s3 + $0x60] sm:$0xff]
      %v503 = vld [vmem:[%s3 + $0x68] sm:$0xff]
      %v504 = vld [vmem:[%s3 + $0x70] sm:$0xff]
      %v505 = vld [vmem:[%s3 + $0x78] sm:$0xff]
      %v506 = vld [vmem:[%s3 + $0x80] sm:$0xff]
      %v507 = vld [vmem:[%s3 + $0x88] sm:$0xff]
      %v508 = vld [vmem:[%s3 + $0x90] sm:$0xff]
      %v509 = vld [vmem:[%s3 + $0x98] sm:$0xff]
      %v510 = vld [vmem:[%s3 + $0xa0] sm:$0xff]
      %v511 = vld [vmem:[%s3 + $0xa8] sm:$0xff]
      %v512 = vld [vmem:[%s3 + $0xb0] sm:$0xff]
      %v513 = vld [vmem:[%s3 + $0xb8] sm:$0xff]
      %v514 = vld [vmem:[%s3 + $0xc0] sm:$0xff]
      %v515 = vld [vmem:[%s3 + $0xc8] sm:$0xff]
      %v516 = vld [vmem:[%s3 + $0xd0] sm:$0xff]
      %v517 = vld [vmem:[%s3 + $0xd8] sm:$0xff]
      %v518 = vld [vmem:[%s3 + $0xe0] sm:$0xff]
      %v519 = vld [vmem:[%s3 + $0xe8] sm:$0xff]
      %v520 = vld [vmem:[%s3 + $0xf0] sm:$0xff]
      %v521 = vld [vmem:[%s3 + $0xf8] sm:$0xff]
      %v522 = vld [vmem:[%s4] sm:$0x3]
      %v524 = vlaneseq
      %v525 = vshrl.u32 %v524, 7
      %v526 = vsub.s32 0, %v525
      %v527 = vrot.slane %v522, %v526
      %v528 = vlaneseq
      %v529 = vshrl.u32 %v528, 7
      %v530 = vsub.s32 1, %v529
      %v531 = vrot.slane %v522, %v530
      %v566 = vunpack.c.l.b16 %v490
      %v567 = vunpack.c.h.b16 %v490
      %v568 = vunpack.c.l.b16 %v491
      %v569 = vunpack.c.h.b16 %v491
      %v570 = vunpack.c.l.b16 %v492
      %v571 = vunpack.c.h.b16 %v492
      %v572 = vunpack.c.l.b16 %v493
      %v573 = vunpack.c.h.b16 %v493
      %v574 = vunpack.c.l.b16 %v494
      %v575 = vunpack.c.h.b16 %v494
      %v576 = vunpack.c.l.b16 %v495
      %v577 = vunpack.c.h.b16 %v495
      %v578 = vunpack.c.l.b16 %v496
      %v579 = vunpack.c.h.b16 %v496
      %v580 = vunpack.c.l.b16 %v497
      %v581 = vunpack.c.h.b16 %v497
      %v582 = vunpack.c.l.b16 %v498
      %v583 = vunpack.c.h.b16 %v498
      %v584 = vunpack.c.l.b16 %v499
      %v585 = vunpack.c.h.b16 %v499
      %v586 = vunpack.c.l.b16 %v500
      %v587 = vunpack.c.h.b16 %v500
      %v588 = vunpack.c.l.b16 %v501
      %v589 = vunpack.c.h.b16 %v501
      %v590 = vunpack.c.l.b16 %v502
      %v591 = vunpack.c.h.b16 %v502
      %v592 = vunpack.c.l.b16 %v503
      %v593 = vunpack.c.h.b16 %v503
      %v594 = vunpack.c.l.b16 %v504
      %v595 = vunpack.c.h.b16 %v504
      %v596 = vunpack.c.l.b16 %v505
      %v597 = vunpack.c.h.b16 %v505
      %v598 = vunpack.c.l.b16 %v506
      %v599 = vunpack.c.h.b16 %v506
      %v600 = vunpack.c.l.b16 %v507
      %v601 = vunpack.c.h.b16 %v507
      %v602 = vunpack.c.l.b16 %v508
      %v603 = vunpack.c.h.b16 %v508
      %v604 = vunpack.c.l.b16 %v509
      %v605 = vunpack.c.h.b16 %v509
      %v606 = vunpack.c.l.b16 %v510
      %v607 = vunpack.c.h.b16 %v510
      %v608 = vunpack.c.l.b16 %v511
      %v609 = vunpack.c.h.b16 %v511
      %v610 = vunpack.c.l.b16 %v512
      %v611 = vunpack.c.h.b16 %v512
      %v612 = vunpack.c.l.b16 %v513
      %v613 = vunpack.c.h.b16 %v513
      %v614 = vunpack.c.l.b16 %v514
      %v615 = vunpack.c.h.b16 %v514
      %v616 = vunpack.c.l.b16 %v515
      %v617 = vunpack.c.h.b16 %v515
      %v618 = vunpack.c.l.b16 %v516
      %v619 = vunpack.c.h.b16 %v516
      %v620 = vunpack.c.l.b16 %v517
      %v621 = vunpack.c.h.b16 %v517
      %v622 = vunpack.c.l.b16 %v518
      %v623 = vunpack.c.h.b16 %v518
      %v624 = vunpack.c.l.b16 %v519
      %v625 = vunpack.c.h.b16 %v519
      %v626 = vunpack.c.l.b16 %v520
      %v627 = vunpack.c.h.b16 %v520
      %v628 = vunpack.c.l.b16 %v521
      %v629 = vunpack.c.h.b16 %v521
      %v630 = vpack.c.b16 %v568, %v566
      %v631 = vpack.c.b16 %v569, %v567
      %v632 = vpack.c.b16 %v572, %v570
      %v633 = vpack.c.b16 %v573, %v571
      %v634 = vpack.c.b16 %v576, %v574
      %v635 = vpack.c.b16 %v577, %v575
      %v636 = vpack.c.b16 %v580, %v578
      %v637 = vpack.c.b16 %v581, %v579
      %v638 = vpack.c.b16 %v584, %v582
      %v639 = vpack.c.b16 %v585, %v583
      %v640 = vpack.c.b16 %v588, %v586
      %v641 = vpack.c.b16 %v589, %v587
      %v642 = vpack.c.b16 %v592, %v590
      %v643 = vpack.c.b16 %v593, %v591
      %v644 = vpack.c.b16 %v596, %v594
      %v645 = vpack.c.b16 %v597, %v595
      %v646 = vpack.c.b16 %v600, %v598
      %v647 = vpack.c.b16 %v601, %v599
      %v648 = vpack.c.b16 %v604, %v602
      %v649 = vpack.c.b16 %v605, %v603
      %v650 = vpack.c.b16 %v608, %v606
      %v651 = vpack.c.b16 %v609, %v607
      %v652 = vpack.c.b16 %v612, %v610
      %v653 = vpack.c.b16 %v613, %v611
      %v654 = vpack.c.b16 %v616, %v614
      %v655 = vpack.c.b16 %v617, %v615
      %v656 = vpack.c.b16 %v620, %v618
      %v657 = vpack.c.b16 %v621, %v619
      %v658 = vpack.c.b16 %v624, %v622
      %v659 = vpack.c.b16 %v625, %v623
      %v660 = vpack.c.b16 %v628, %v626
      %v661 = vpack.c.b16 %v629, %v627
      %694 = vmatprep.subr.bf16.mxu0 %v631
      %695 = vmatpush1.bf16.msra.mxu0 %v630
      %696 = vmatprep.subr.bf16.mxu0 %v633
      %697 = vmatpush1.bf16.msra.mxu0 %v632
      %698 = vmatprep.subr.bf16.mxu0 %v635
      %699 = vmatpush1.bf16.msra.mxu0 %v634
      %700 = vmatprep.subr.bf16.mxu0 %v637
      %701 = vmatpush1.bf16.msra.mxu0 %v636
      %702 = vmatprep.subr.bf16.mxu0 %v639
      %703 = vmatpush1.bf16.msra.mxu0 %v638
      %704 = vmatprep.subr.bf16.mxu0 %v641
      %705 = vmatpush1.bf16.msra.mxu0 %v640
      %706 = vmatprep.subr.bf16.mxu0 %v643
      %707 = vmatpush1.bf16.msra.mxu0 %v642
      %708 = vmatprep.subr.bf16.mxu0 %v645
      %709 = vmatpush1.bf16.msra.mxu0 %v644
      %710 = vmatprep.subr.bf16.mxu0 %v647
      %711 = vmatpush1.bf16.msra.mxu0 %v646
      %712 = vmatprep.subr.bf16.mxu0 %v649
      %713 = vmatpush1.bf16.msra.mxu0 %v648
      %714 = vmatprep.subr.bf16.mxu0 %v651
      %715 = vmatpush1.bf16.msra.mxu0 %v650
      %716 = vmatprep.subr.bf16.mxu0 %v653
      %717 = vmatpush1.bf16.msra.mxu0 %v652
      %718 = vmatprep.subr.bf16.mxu0 %v655
      %719 = vmatpush1.bf16.msra.mxu0 %v654
      %720 = vmatprep.subr.bf16.mxu0 %v657
      %721 = vmatpush1.bf16.msra.mxu0 %v656
      %722 = vmatprep.subr.bf16.mxu0 %v659
      %723 = vmatpush1.bf16.msra.mxu0 %v658
      %724 = vmatprep.subr.bf16.mxu0 %v661
      %725 = vmatpush1.bf16.msra.mxu0 %v660
      %726 = vmatprep.mubr.bf16.mxu0 %v487
      %727 = vmatmul.mubr.bf16.gmra.mrb[0].mxu0 %v486
      %v728 = vpop.f32.mrb[0].mxu0
      %v729 = vadd.f32 %v527, %v728
      %v730 = vpop.f32.mrb[0].mxu0
      %v731 = vadd.f32 %v531, %v730
      %v732 = vpop.f32.mrb[0].mxu0
      %v733 = vadd.f32 %v527, %v732
      %v734 = vpop.f32.mrb[0].mxu0
      %v735 = vadd.f32 %v531, %v734
      %736 = vmatprep.mubr.bf16.mxu0 %v489
      %737 = vmatmul.mubr.bf16.gmra.mrb[0].mxu0 %v488
      %v738 = vpop.f32.mrb[0].mxu0
      %v739 = vadd.f32 %v527, %v738
      %v740 = vpop.f32.mrb[0].mxu0
      %v741 = vadd.f32 %v531, %v740
      %v742 = vpop.f32.mrb[0].mxu0
      %v743 = vadd.f32 %v527, %v742
      %v744 = vpop.f32.mrb[0].mxu0
      %v745 = vadd.f32 %v531, %v744
      %746 = vdwg.mxu0
      %v747 = vtanh.pop %v729
      %v748 = vtanh.pop %v731
      %v749 = vtanh.pop %v733
      %v750 = vtanh.pop %v735
      %v751 = vtanh.pop %v739
      %v752 = vtanh.pop %v741
      %v753 = vtanh.pop %v743
      %v754 = vtanh.pop %v745
      %v755 = vpack.c.bf16 %v749, %v747
      %v756 = vpack.c.bf16 %v750, %v748
      %v757 = vpack.c.bf16 %v753, %v751
      %v758 = vpack.c.bf16 %v754, %v752
      %v759 = vld [vmem:[%s5] sm:$0xf]
      %v760 = vld [vmem:[%s5 + $0x4] sm:$0xf]
      %v761 = vld [vmem:[%s5 + $0x8] sm:$0xf]
      %v762 = vld [vmem:[%s5 + $0xc] sm:$0xf]
      %v763 = vld [vmem:[%s5 + $0x10] sm:$0xf]
      %v764 = vld [vmem:[%s5 + $0x14] sm:$0xf]
      %v765 = vld [vmem:[%s5 + $0x18] sm:$0xf]
      %v766 = vld [vmem:[%s5 + $0x1c] sm:$0xf]
      %v767 = vld [vmem:[%s5 + $0x20] sm:$0xf]
      %v768 = vld [vmem:[%s5 + $0x24] sm:$0xf]
      %v769 = vld [vmem:[%s5 + $0x28] sm:$0xf]
      %v770 = vld [vmem:[%s5 + $0x2c] sm:$0xf]
      %v771 = vld [vmem:[%s5 + $0x30] sm:$0xf]
      %v772 = vld [vmem:[%s5 + $0x34] sm:$0xf]
      %v773 = vld [vmem:[%s5 + $0x38] sm:$0xf]
      %v774 = vld [vmem:[%s5 + $0x3c] sm:$0xf]
      %v775 = vld [vmem:[%s5 + $0x40] sm:$0xf]
      %v776 = vld [vmem:[%s5 + $0x44] sm:$0xf]
      %v777 = vld [vmem:[%s5 + $0x48] sm:$0xf]
      %v778 = vld [vmem:[%s5 + $0x4c] sm:$0xf]
      %v779 = vld [vmem:[%s5 + $0x50] sm:$0xf]
      %v780 = vld [vmem:[%s5 + $0x54] sm:$0xf]
      %v781 = vld [vmem:[%s5 + $0x58] sm:$0xf]
      %v782 = vld [vmem:[%s5 + $0x5c] sm:$0xf]
      %v783 = vld [vmem:[%s5 + $0x60] sm:$0xf]
      %v784 = vld [vmem:[%s5 + $0x64] sm:$0xf]
      %v785 = vld [vmem:[%s5 + $0x68] sm:$0xf]
      %v786 = vld [vmem:[%s5 + $0x6c] sm:$0xf]
      %v787 = vld [vmem:[%s5 + $0x70] sm:$0xf]
      %v788 = vld [vmem:[%s5 + $0x74] sm:$0xf]
      %v789 = vld [vmem:[%s5 + $0x78] sm:$0xf]
      %v790 = vld [vmem:[%s5 + $0x7c] sm:$0xf]
      %v791 = vld [vmem:[%s6] sm:$0x1]
      %v793 = vlaneseq
      %v794 = vshrl.u32 %v793, 7
      %v795 = vsub.s32 0, %v794
      %v796 = vrot.slane %v791, %v795
      %v830 = vunpack.c.l.b16 %v759
      %v831 = vunpack.c.l.b16 %v760
      %v832 = vunpack.c.l.b16 %v761
      %v833 = vunpack.c.l.b16 %v762
      %v834 = vunpack.c.l.b16 %v763
      %v835 = vunpack.c.l.b16 %v764
      %v836 = vunpack.c.l.b16 %v765
      %v837 = vunpack.c.l.b16 %v766
      %v838 = vunpack.c.l.b16 %v767
      %v839 = vunpack.c.l.b16 %v768
      %v840 = vunpack.c.l.b16 %v769
      %v841 = vunpack.c.l.b16 %v770
      %v842 = vunpack.c.l.b16 %v771
      %v843 = vunpack.c.l.b16 %v772
      %v844 = vunpack.c.l.b16 %v773
      %v845 = vunpack.c.l.b16 %v774
      %v846 = vunpack.c.l.b16 %v775
      %v847 = vunpack.c.l.b16 %v776
      %v848 = vunpack.c.l.b16 %v777
      %v849 = vunpack.c.l.b16 %v778
      %v850 = vunpack.c.l.b16 %v779
      %v851 = vunpack.c.l.b16 %v780
      %v852 = vunpack.c.l.b16 %v781
      %v853 = vunpack.c.l.b16 %v782
      %v854 = vunpack.c.l.b16 %v783
      %v855 = vunpack.c.l.b16 %v784
      %v856 = vunpack.c.l.b16 %v785
      %v857 = vunpack.c.l.b16 %v786
      %v858 = vunpack.c.l.b16 %v787
      %v859 = vunpack.c.l.b16 %v788
      %v860 = vunpack.c.l.b16 %v789
      %v861 = vunpack.c.l.b16 %v790
      %v862 = vpack.c.b16 %v831, %v830
      %v863 = vpack.c.b16 %v833, %v832
      %v864 = vpack.c.b16 %v835, %v834
      %v865 = vpack.c.b16 %v837, %v836
      %v866 = vpack.c.b16 %v839, %v838
      %v867 = vpack.c.b16 %v841, %v840
      %v868 = vpack.c.b16 %v843, %v842
      %v869 = vpack.c.b16 %v845, %v844
      %v870 = vpack.c.b16 %v847, %v846
      %v871 = vpack.c.b16 %v849, %v848
      %v872 = vpack.c.b16 %v851, %v850
      %v873 = vpack.c.b16 %v853, %v852
      %v874 = vpack.c.b16 %v855, %v854
      %v875 = vpack.c.b16 %v857, %v856
      %v876 = vpack.c.b16 %v859, %v858
      %v877 = vpack.c.b16 %v861, %v860
      %894 = vmatprep.subr.bf16.mxu0 0
      %895 = vmatpush1.bf16.msra.mxu0 %v862
      %896 = vmatprep.subr.bf16.mxu0 0
      %897 = vmatpush1.bf16.msra.mxu0 %v863
      %898 = vmatprep.subr.bf16.mxu0 0
      %899 = vmatpush1.bf16.msra.mxu0 %v864
      %900 = vmatprep.subr.bf16.mxu0 0
      %901 = vmatpush1.bf16.msra.mxu0 %v865
      %902 = vmatprep.subr.bf16.mxu0 0
      %903 = vmatpush1.bf16.msra.mxu0 %v866
      %904 = vmatprep.subr.bf16.mxu0 0
      %905 = vmatpush1.bf16.msra.mxu0 %v867
      %906 = vmatprep.subr.bf16.mxu0 0
      %907 = vmatpush1.bf16.msra.mxu0 %v868
      %908 = vmatprep.subr.bf16.mxu0 0
      %909 = vmatpush1.bf16.msra.mxu0 %v869
      %910 = vmatprep.subr.bf16.mxu0 0
      %911 = vmatpush1.bf16.msra.mxu0 %v870
      %912 = vmatprep.subr.bf16.mxu0 0
      %913 = vmatpush1.bf16.msra.mxu0 %v871
      %914 = vmatprep.subr.bf16.mxu0 0
      %915 = vmatpush1.bf16.msra.mxu0 %v872
      %916 = vmatprep.subr.bf16.mxu0 0
      %917 = vmatpush1.bf16.msra.mxu0 %v873
      %918 = vmatprep.subr.bf16.mxu0 0
      %919 = vmatpush1.bf16.msra.mxu0 %v874
      %920 = vmatprep.subr.bf16.mxu0 0
      %921 = vmatpush1.bf16.msra.mxu0 %v875
      %922 = vmatprep.subr.bf16.mxu0 0
      %923 = vmatpush1.bf16.msra.mxu0 %v876
      %924 = vmatprep.subr.bf16.mxu0 0
      %925 = vmatpush1.bf16.msra.mxu0 %v877
      %926 = vmatprep.mubr.bf16.mxu0 %v756
      %927 = vmatmul.mubr.bf16.gmra.mrb[0].mxu0 %v755
      %v928 = vpop.f32.mrb[0].mxu0
      %v929 = vadd.f32 %v796, %v928
      %v930 = vpop.f32.mrb[0].mxu0
      %v931 = vpop.f32.mrb[0].mxu0
      %v932 = vadd.f32 %v796, %v931
      %v933 = vpop.f32.mrb[0].mxu0
      %934 = vmatprep.mubr.bf16.mxu0 %v758
      %935 = vmatmul.mubr.bf16.gmra.mrb[0].mxu0 %v757
      %v936 = vpop.f32.mrb[0].mxu0
      %v937 = vadd.f32 %v796, %v936
      %v938 = vpop.f32.mrb[0].mxu0
      %v939 = vpop.f32.mrb[0].mxu0
      %v940 = vadd.f32 %v796, %v939
      %v941 = vpop.f32.mrb[0].mxu0
      %942 = vdwg.mxu0
      %v943 = vadd.f32 %v307, %v929
      %v944 = vadd.f32 %v308, %v932
      %v945 = vadd.f32 %v309, %v937
      %v946 = vadd.f32 %v310, %v940
      %947 = vst [vmem:[%s292] sm:$0xff] %v943
      %948 = vst [vmem:[%s292 + $0x8] sm:$0xff] %v944
      %949 = vst [vmem:[%s292 + $0x10] sm:$0xff] %v945
      %950 = vst [vmem:[%s292 + $0x18] sm:$0xff] %v946
      %s951 = smul.u32 4, %s22
      %p952 = scmp.lt.s32.totalorder %s951, 7
      %s953 = scalar_select %p952, %s951, 7
      %s954 = smul.addr %s953, 8
      %s955 = scalar_lea.vmem %s7, %s954
      // Predicated region
      $region53: #{euler_step.1} parent=47 // pred_check
        %p956 = pneg %p200
      $region54: #{euler_step.1} parent=47 // pred_check_branch
        %958 = sbr.rel (%p956) target = $region56
      $region55: #{euler_step.1} parent=47 // pred_region
        %s959 = smul.u32 4, %s22
      $region56: #{euler_step.1} parent=47 // pred_fallthru
        _
    $region48: #{euler_step.1} parent=5 // pred_fallthru
      _
    %p960 = scmp.le.s32.totalorder 2, %s13
    // Predicated region
    $region57: #{euler_step.1} parent=5 // pred_check
      %p961 = pneg %p960
    $region58: #{euler_step.1} parent=5 // pred_check_branch
      %963 = sbr.rel (%p961) target = $region60
    $region59: #{euler_step.1} parent=5 // pred_region
      %s964 = ssub.s32 %s13, 2
      // Predicated region
      $region61: #{euler_step.1} parent=59 // pred_check
        %p965 = pneg %p206
      $region62: #{euler_step.1} parent=59 // pred_check_branch
        %967 = sbr.rel (%p965) target = $region64
      $region63: #{euler_step.1} parent=59 // pred_region
        %s968 = smul.u32 4, %s24
        %p969 = scmp.lt.s32.totalorder %s968, 7
        %s970 = scalar_select %p969, %s968, 7
        %s971 = smul.addr %s970, 8
        %s972 = scalar_lea.vmem %s7, %s971
      $region64: #{euler_step.1} parent=59 // pred_fallthru
        _
    $region60: #{euler_step.1} parent=5 // pred_fallthru
      _
  $region6: #{euler_step.1} parent=0 // loop_footer
    %s17 = sadd.s32 1, %s13
  $region7: #{euler_step.1} parent=0 // loop_footer_branch
    %12 = sbr.rel target = $region3
  $region8: #{euler_step.1} parent=0 // loop_exit
    _

</llo_original>
